<compile_context>
chip_gen: v7x
topology: tpu7x:2x2x1
jax: 0.10.0
libtpu: 0.0.40
codegen_flags: <defaults>
</compile_context>

<pallas_src>
import math
import functools

import jax
import jax.numpy as jnp
from jax.experimental import pallas as pl
from jax.experimental.pallas import tpu as pltpu

_LANE = 128            # TPU vector lane width
_MAX_TILE_ROWS = 1024  # cap on 8-aligned row tiles (well under VMEM limits everywhere)

# ---------------------------------------------------------------------------
# Fused sincos: one shared Cody-Waite range reduction feeding both polynomials.
# Coefficients are the standard Cephes single-precision minimax sets on
# [-pi/4, pi/4]; pi/2 is split into three exactly-representable chunks.
# ---------------------------------------------------------------------------
_TWO_OVER_PI = 0.6366197723675814
_PIO2_C1 = 1.5703125                     # exact in f32
_PIO2_C2 = 4.837512969970703125e-4       # exact in f32
_PIO2_C3 = 7.549789948768648e-8
_SIN_C1, _SIN_C2, _SIN_C3 = -1.6666654611e-1, 8.3321608736e-3, -1.9515295891e-4
_COS_C1, _COS_C2, _COS_C3 = 4.166664568298827e-2, -1.388731625493765e-3, 2.443315711809948e-5


def _sincos(ang):
    """Return (sin(ang), cos(ang)) with a single shared range reduction."""
    q = jnp.floor(ang * _TWO_OVER_PI + 0.5)         # nearest quadrant
    r = ang - q * _PIO2_C1                           # Cody-Waite: r = ang - q*pi/2
    r = r - q * _PIO2_C2
    r = r - q * _PIO2_C3
    z = r * r
    sin_r = r + r * z * (_SIN_C1 + z * (_SIN_C2 + z * _SIN_C3))
    cos_r = 1.0 - 0.5 * z + z * z * (_COS_C1 + z * (_COS_C2 + z * _COS_C3))
    j = q.astype(jnp.int32) & 3                      # mathematical mod 4 (neg-safe)
    swap = (j == 1) | (j == 3)
    sin_sign = jnp.where((j == 2) | (j == 3), -1.0, 1.0)
    cos_sign = jnp.where((j == 1) | (j == 2), -1.0, 1.0)
    s = jnp.where(swap, cos_r, sin_r) * sin_sign
    c = jnp.where(swap, sin_r, cos_r) * cos_sign
    return s, c


# ---------------------------------------------------------------------------
# Kernels
# ---------------------------------------------------------------------------
def _direct_kernel(x_ref, out_ref, *, scale: float, month: bool, F: int):
    """F >= 128 path: write sin into lanes [0, F) and cos into [F, 2F)."""
    x = x_ref[...].astype(jnp.float32)
    if month:
        x = x - 1.0
    ang = x * scale
    s, c = _sincos(ang)
    out_ref[:, :F] = s.astype(out_ref.dtype)
    out_ref[:, F:] = c.astype(out_ref.dtype)


def _lane_dense_kernel(x_ref, sin_ref, cos_ref, *, scale: float, month: bool):
    """Small-F fallback: fully lane-dense (tr, 128) tiles, two dense outputs."""
    x = x_ref[...].astype(jnp.float32)
    if month:
        x = x - 1.0
    ang = x * scale
    s, c = _sincos(ang)
    sin_ref[...] = s.astype(sin_ref.dtype)
    cos_ref[...] = c.astype(cos_ref.dtype)


# ---------------------------------------------------------------------------
# Tiling helper: 8-aligned row tiles, aiming for >= ~8 grid steps so the
# "parallel" grid axis can be sharded across both v7x TensorCores.
# ---------------------------------------------------------------------------
def _pick_row_tile(rows: int, cap: int = _MAX_TILE_ROWS) -> int:
    cap = max(8, (cap // 8) * 8)
    rows8 = 8 * pl.cdiv(rows, 8)
    if rows8 <= min(cap, 128):
        return rows                                   # single full-extent block
    tile = max(128, 8 * pl.cdiv(pl.cdiv(rows, 8), 8))  # ~8 steps, 8-aligned
    return min(tile, cap, rows8)


# ---------------------------------------------------------------------------
# Wrapper
# ---------------------------------------------------------------------------
def cyclical_embedding(x: jax.Array, max_value_scale: float, month: bool = False,
                       out_dtype=jnp.float32) -> jax.Array:
    """x: (B, F) any real/int dtype -> (B, 2, F), matching torch.stack(dim=1)."""
    assert x.ndim == 2, "expected (B, F) input"
    B, F = x.shape
    N = B * F
    scale = 2.0 * math.pi / float(max_value_scale)
    in_bytes = jnp.dtype(x.dtype).itemsize
    out_bytes = jnp.dtype(out_dtype).itemsize

    if F >= _LANE:
        # ---- direct-layout path: single lane-dense (B, 2F) output, no pad/stack pass.
        tb = _pick_row_tile(B, cap=max(8, (_MAX_TILE_ROWS * _LANE) // (2 * F)))
        grid = (pl.cdiv(B, tb),)
        kernel = functools.partial(_direct_kernel, scale=scale, month=bool(month), F=F)
        out2f = pl.pallas_call(
            kernel,
            grid=grid,
            out_shape=jax.ShapeDtypeStruct((B, 2 * F), out_dtype),
            in_specs=[pl.BlockSpec((tb, F), lambda i: (i, 0))],
            out_specs=pl.BlockSpec((tb, 2 * F), lambda i: (i, 0)),
            compiler_params=pltpu.CompilerParams(dimension_semantics=("parallel",)),
            cost_estimate=pl.CostEstimate(
                flops=48 * N, transcendentals=0,
                bytes_accessed=N * in_bytes + 2 * N * out_bytes),
        )(x)
        # Contiguous reshape only; sin occupies [:, 0, :], cos [:, 1, :].
        return out2f.reshape(B, 2, F)

    # ---- lane-dense fallback for narrow F: flatten + pad to (R, 128).
    R = pl.cdiv(N, _LANE)
    n_pad = R * _LANE - N
    x_flat = x.reshape(-1)
    if n_pad:
        x_flat = jnp.pad(x_flat, (0, n_pad))
    x2d = x_flat.reshape(R, _LANE)

    tr = _pick_row_tile(R)
    grid = (pl.cdiv(R, tr),)
    kernel = functools.partial(_lane_dense_kernel, scale=scale, month=bool(month))
    sin2d, cos2d = pl.pallas_call(
        kernel,
        grid=grid,
        out_shape=(
            jax.ShapeDtypeStruct((R, _LANE), out_dtype),
            jax.ShapeDtypeStruct((R, _LANE), out_dtype),
        ),
        in_specs=[pl.BlockSpec((tr, _LANE), lambda i: (i, 0))],
        out_specs=(
            pl.BlockSpec((tr, _LANE), lambda i: (i, 0)),
            pl.BlockSpec((tr, _LANE), lambda i: (i, 0)),
        ),
        compiler_params=pltpu.CompilerParams(dimension_semantics=("parallel",)),
        cost_estimate=pl.CostEstimate(
            flops=48 * R * _LANE, transcendentals=0,
            bytes_accessed=R * _LANE * (in_bytes + 2 * out_bytes)),
    )(x2d)

    # Restore torch layout (sin at channel 0, cos at channel 1) at trace level.
    sin_bf = sin2d.reshape(-1)[:N].reshape(B, F)
    cos_bf = cos2d.reshape(-1)[:N].reshape(B, F)
    return jnp.stack((sin_bf, cos_bf), axis=1)


# ---------------------------------------------------------------------------
# Reference + tests
# ---------------------------------------------------------------------------
def _reference(x, max_value_scale, month=False):
    xf = x.astype(jnp.float32)
    if month:
        xf = xf - 1.0
    ang = 2.0 * math.pi * xf / max_value_scale
    return jnp.stack((jnp.sin(ang), jnp.cos(ang)), axis=1)


if __name__ == "__main__":
    key = jax.random.PRNGKey(0)

    # 1) Narrow-F fallback path (month semantics), int input in [1, 12].
    B, F = 2, 16
    x = jax.random.randint(key, (B, F), 1, 13).astype(jnp.int32)
    out = jax.block_until_ready(cyclical_embedding(x, 12.0, month=True))
    ref = _reference(x, 12.0, month=True)
    assert out.shape == (B, 2, F), out.shape
    assert jnp.allclose(out, ref, atol=1e-5, rtol=1e-5), "mismatch vs reference (fallback)"

    # 2) Direct-layout path, lane-aligned F.
    x2 = jax.random.uniform(jax.random.PRNGKey(1), (16, 256), dtype=jnp.float32) * 24.0
    out2 = jax.block_until_ready(cyclical_embedding(x2, 24.0, month=False))
    ref2 = _reference(x2, 24.0, month=False)
    assert out2.shape == (16, 2, 256), out2.shape
    assert jnp.allclose(out2, ref2, atol=1e-5, rtol=1e-5), "mismatch vs reference (direct aligned)"

    # 3) Direct-layout path, non-128-aligned F (mid-lane cos write).
    x3 = jax.random.uniform(jax.random.PRNGKey(2), (5, 160), dtype=jnp.float32) * 7.0
    out3 = jax.block_until_ready(cyclical_embedding(x3, 7.0, month=False))
    ref3 = _reference(x3, 7.0, month=False)
    assert out3.shape == (5, 2, 160), out3.shape
    assert jnp.allclose(out3, ref3, atol=1e-5, rtol=1e-5), "mismatch vs reference (direct unaligned)"

    print("KERNEL_OK")
</pallas_src>

<mosaic_0001>
module attributes {stable_mosaic.version = 11 : i64} {
  func.func @_lane_dense_kernel(%arg0: i32, %arg1: memref<1x128xi32, #tpu.memory_space<vmem>>, %arg2: memref<1x128xf32, #tpu.memory_space<vmem>>, %arg3: memref<1x128xf32, #tpu.memory_space<vmem>>) attributes {dimension_semantics = [#tpu.dimension_semantics<parallel>], iteration_bounds = array<i64: 1>, scalar_prefetch = 0 : i64, scratch_operands = 0 : i64, tpu.core_type = #tpu.core_type<tc>, window_params = [{transform_indices = @transform_0, window_bounds = array<i64: 1, 128>}, {transform_indices = @transform_1, window_bounds = array<i64: 1, 128>}, {transform_indices = @transform_2, window_bounds = array<i64: 1, 128>}]} {
    %c0 = arith.constant 0 : index
    %c0_0 = arith.constant 0 : index
    %0 = vector.load %arg1[%c0, %c0_0] : memref<1x128xi32, #tpu.memory_space<vmem>>, vector<1x128xi32>
    %1 = arith.sitofp %0 : vector<1x128xi32> to vector<1x128xf32>
    %cst = arith.constant 1.000000e+00 : f32
    %2 = vector.broadcast %cst : f32 to vector<1x128xf32>
    %3 = arith.subf %1, %2 : vector<1x128xf32>
    %cst_1 = arith.constant 0.52359879 : f32
    %4 = vector.broadcast %cst_1 : f32 to vector<1x128xf32>
    %5 = arith.mulf %3, %4 : vector<1x128xf32>
    %cst_2 = arith.constant 0.636619746 : f32
    %6 = vector.broadcast %cst_2 : f32 to vector<1x128xf32>
    %7 = arith.mulf %5, %6 : vector<1x128xf32>
    %cst_3 = arith.constant 5.000000e-01 : f32
    %8 = vector.broadcast %cst_3 : f32 to vector<1x128xf32>
    %9 = arith.addf %7, %8 : vector<1x128xf32>
    %10 = math.floor %9 : vector<1x128xf32>
    %cst_4 = arith.constant 1.5703125 : f32
    %11 = vector.broadcast %cst_4 : f32 to vector<1x128xf32>
    %12 = arith.mulf %10, %11 : vector<1x128xf32>
    %13 = arith.subf %5, %12 : vector<1x128xf32>
    %cst_5 = arith.constant 4.83751297E-4 : f32
    %14 = vector.broadcast %cst_5 : f32 to vector<1x128xf32>
    %15 = arith.mulf %10, %14 : vector<1x128xf32>
    %16 = arith.subf %13, %15 : vector<1x128xf32>
    %cst_6 = arith.constant 7.549790e-08 : f32
    %17 = vector.broadcast %cst_6 : f32 to vector<1x128xf32>
    %18 = arith.mulf %10, %17 : vector<1x128xf32>
    %19 = arith.subf %16, %18 : vector<1x128xf32>
    %20 = arith.mulf %19, %19 : vector<1x128xf32>
    %21 = arith.mulf %19, %20 : vector<1x128xf32>
    %cst_7 = arith.constant -1.95152956E-4 : f32
    %22 = vector.broadcast %cst_7 : f32 to vector<1x128xf32>
    %23 = arith.mulf %20, %22 : vector<1x128xf32>
    %cst_8 = arith.constant 0.00833216123 : f32
    %24 = vector.broadcast %cst_8 : f32 to vector<1x128xf32>
    %25 = arith.addf %24, %23 : vector<1x128xf32>
    %26 = arith.mulf %20, %25 : vector<1x128xf32>
    %cst_9 = arith.constant -0.166666552 : f32
    %27 = vector.broadcast %cst_9 : f32 to vector<1x128xf32>
    %28 = arith.addf %27, %26 : vector<1x128xf32>
    %29 = arith.mulf %21, %28 : vector<1x128xf32>
    %30 = arith.addf %19, %29 : vector<1x128xf32>
    %cst_10 = arith.constant 5.000000e-01 : f32
    %31 = vector.broadcast %cst_10 : f32 to vector<1x128xf32>
    %32 = arith.mulf %31, %20 : vector<1x128xf32>
    %cst_11 = arith.constant 1.000000e+00 : f32
    %33 = vector.broadcast %cst_11 : f32 to vector<1x128xf32>
    %34 = arith.subf %33, %32 : vector<1x128xf32>
    %35 = arith.mulf %20, %20 : vector<1x128xf32>
    %cst_12 = arith.constant 2.44331568E-5 : f32
    %36 = vector.broadcast %cst_12 : f32 to vector<1x128xf32>
    %37 = arith.mulf %20, %36 : vector<1x128xf32>
    %cst_13 = arith.constant -0.00138873165 : f32
    %38 = vector.broadcast %cst_13 : f32 to vector<1x128xf32>
    %39 = arith.addf %38, %37 : vector<1x128xf32>
    %40 = arith.mulf %20, %39 : vector<1x128xf32>
    %cst_14 = arith.constant 0.0416666456 : f32
    %41 = vector.broadcast %cst_14 : f32 to vector<1x128xf32>
    %42 = arith.addf %41, %40 : vector<1x128xf32>
    %43 = arith.mulf %35, %42 : vector<1x128xf32>
    %44 = arith.addf %34, %43 : vector<1x128xf32>
    %45 = arith.fptosi %10 : vector<1x128xf32> to vector<1x128xi32>
    %c3_i32 = arith.constant 3 : i32
    %46 = vector.broadcast %c3_i32 : i32 to vector<1x128xi32>
    %47 = arith.andi %45, %46 : vector<1x128xi32>
    %c1_i32 = arith.constant 1 : i32
    %48 = vector.broadcast %c1_i32 : i32 to vector<1x128xi32>
    %49 = arith.cmpi eq, %47, %48 : vector<1x128xi32>
    %c3_i32_15 = arith.constant 3 : i32
    %50 = vector.broadcast %c3_i32_15 : i32 to vector<1x128xi32>
    %51 = arith.cmpi eq, %47, %50 : vector<1x128xi32>
    %52 = arith.ori %49, %51 : vector<1x128xi1>
    %c2_i32 = arith.constant 2 : i32
    %53 = vector.broadcast %c2_i32 : i32 to vector<1x128xi32>
    %54 = arith.cmpi eq, %47, %53 : vector<1x128xi32>
    %c3_i32_16 = arith.constant 3 : i32
    %55 = vector.broadcast %c3_i32_16 : i32 to vector<1x128xi32>
    %56 = arith.cmpi eq, %47, %55 : vector<1x128xi32>
    %57 = arith.ori %54, %56 : vector<1x128xi1>
    %cst_17 = arith.constant -1.000000e+00 : f32
    %cst_18 = arith.constant 1.000000e+00 : f32
    %58 = vector.broadcast %cst_17 : f32 to vector<1x128xf32>
    %59 = vector.broadcast %cst_18 : f32 to vector<1x128xf32>
    %60 = arith.select %57, %58, %59 : vector<1x128xi1>, vector<1x128xf32>
    %c1_i32_19 = arith.constant 1 : i32
    %61 = vector.broadcast %c1_i32_19 : i32 to vector<1x128xi32>
    %62 = arith.cmpi eq, %47, %61 : vector<1x128xi32>
    %c2_i32_20 = arith.constant 2 : i32
    %63 = vector.broadcast %c2_i32_20 : i32 to vector<1x128xi32>
    %64 = arith.cmpi eq, %47, %63 : vector<1x128xi32>
    %65 = arith.ori %62, %64 : vector<1x128xi1>
    %cst_21 = arith.constant -1.000000e+00 : f32
    %cst_22 = arith.constant 1.000000e+00 : f32
    %66 = vector.broadcast %cst_21 : f32 to vector<1x128xf32>
    %67 = vector.broadcast %cst_22 : f32 to vector<1x128xf32>
    %68 = arith.select %65, %66, %67 : vector<1x128xi1>, vector<1x128xf32>
    %69 = arith.select %52, %44, %30 : vector<1x128xi1>, vector<1x128xf32>
    %70 = arith.mulf %69, %60 : vector<1x128xf32>
    %71 = arith.select %52, %30, %44 : vector<1x128xi1>, vector<1x128xf32>
    %72 = arith.mulf %71, %68 : vector<1x128xf32>
    %c0_23 = arith.constant 0 : index
    %c0_24 = arith.constant 0 : index
    %73 = vector.load %arg2[%c0_23, %c0_24] : memref<1x128xf32, #tpu.memory_space<vmem>>, vector<1x128xf32>
    tpu.vector_store %arg2[%c0_23, %c0_24], %70 {strides = array<i32>} : memref<1x128xf32, #tpu.memory_space<vmem>>, vector<1x128xf32>,
    %c0_25 = arith.constant 0 : index
    %c0_26 = arith.constant 0 : index
    %74 = vector.load %arg3[%c0_25, %c0_26] : memref<1x128xf32, #tpu.memory_space<vmem>>, vector<1x128xf32>
    tpu.vector_store %arg3[%c0_25, %c0_26], %72 {strides = array<i32>} : memref<1x128xf32, #tpu.memory_space<vmem>>, vector<1x128xf32>,
    return
  }
  func.func @transform_0(%arg0: i32) -> (i32, i32) {
    %c0_i32 = arith.constant 0 : i32
    %c0_i32_0 = arith.constant 0 : i32
    return %arg0, %c0_i32 : i32, i32
  }
  func.func @transform_1(%arg0: i32) -> (i32, i32) {
    %c0_i32 = arith.constant 0 : i32
    %c0_i32_0 = arith.constant 0 : i32
    return %arg0, %c0_i32 : i32, i32
  }
  func.func @transform_2(%arg0: i32) -> (i32, i32) {
    %c0_i32 = arith.constant 0 : i32
    %c0_i32_0 = arith.constant 0 : i32
    return %arg0, %c0_i32 : i32, i32
  }
}

</mosaic_0001>

<llo_original>
// kernel: tpu_custom_call.1
$region0: #{tpu_custom_call.1}
  #allocation0 [shape = 'u32[]', space=smem, size = 0x4, offset = 0x4, fixed_abs, tag = 'smem constant byte address 0x4 - core index']
  #allocation1 [shape = 'u32[144,128]{1,0:T(1,128)}', space=vmem, size = 0x12000, scoped, tag = 'internal scratch']
  %s0 = inlined_call_operand.hbm [shape: s32[1,128], index: 0, kind: input, shape index: {}]
  %s1 = inlined_call_operand.hbm [shape: f32[1,128], index: 1, kind: output, shape index: {0}]
  %s2 = inlined_call_operand.hbm [shape: f32[1,128], index: 2, kind: output, shape index: {1}]
  %3 = xla_tuple %s1, %s2
  %s4 = sld [smem:[#allocation0]]
  $region26: #{tpu_custom_call.1} parent=0
    _
  %s6 = ssub.s32 1, %s4
  %s7 = scalar_select 0, %s6, %s4
  $region1: #{tpu_custom_call.1} parent=0
    #allocation2 [shape = 'u8[512]{0}', space=vmem, size = 0x400, scoped, tag = 'input window, operand 0, single buffered']
    #allocation3 [shape = 's32[1]{0}', space=sflag, size = 0x4, scoped, tag = 'scoped memory for tpu_custom_call.1']
    #allocation4 [shape = 's32[1]{0}', space=sflag, size = 0x4, scoped, tag = 'scoped memory for tpu_custom_call.1']
    #allocation5 [shape = 'u8[512]{0}', space=vmem, size = 0x400, scoped, tag = 'output window, operand 0, single buffered']
    #allocation6 [shape = 'u8[512]{0}', space=vmem, size = 0x400, scoped, tag = 'output window, operand 1, single buffered']
    #allocation7 [shape = 's32[1]{0}', space=sflag, size = 0x4, scoped, tag = 'scoped memory for tpu_custom_call.1']
    %8 = vsyncpa [#allocation3], 0
    %9 = vsyncpa [#allocation4], 0
    %10 = vsyncpa [#allocation7], 0
    // Predicated region
    $region2: #{tpu_custom_call.1} parent=1 // pred_check
      _
    $region3: #{tpu_custom_call.1} parent=1 // pred_check_branch
      %12 = sbr.rel (0) target = $region5
    $region4: #{tpu_custom_call.1} parent=1 // pred_region
      %s14 = ssub.s32 16, 16
      %15 = vsyncadd [#allocation3], %s14
      %s17 = sshll.u32 [#allocation2], 4
      %s18 = int_to_ptr.vmem [resolvable:$true] %s17
      %20 = dma.hbm_to_vmem [thread:$0]  %s0, 16, %s18, [#allocation3]
    $region5: #{tpu_custom_call.1} parent=1 // pred_fallthru
      _
    // Predicated region
    $region6: #{tpu_custom_call.1} parent=1 // pred_check
      _
    $region7: #{tpu_custom_call.1} parent=1 // pred_check_branch
      %22 = sbr.rel (0) target = $region9
    $region8: #{tpu_custom_call.1} parent=1 // pred_region
      %23 = dma.done [#allocation3], 16
    $region9: #{tpu_custom_call.1} parent=1 // pred_fallthru
      _
    %v24 = vld [vmem:[#allocation2] sm:$0x1]
    %v25 = vcvt.s32.f32 %v24
    %v26 = vsub.f32 %v25, 1.0
    %v27 = vmul.f32 %v26, 0.5235988
    %v28 = vmul.f32 %v27, 0.63661975
    %v29 = vadd.f32 %v28, 0.5
    %v30 = vfloor.f32 %v29
    %v31 = vmul.f32 %v30, 1.5703125
    %v32 = vsub.f32 %v27, %v31
    %v33 = vmul.f32 %v30, 0.0004837513
    %v34 = vsub.f32 %v32, %v33
    %v35 = vmul.f32 %v30, 7.54979e-08
    %v36 = vsub.f32 %v34, %v35
    %v37 = vmul.f32 %v36, %v36
    %v38 = vmul.f32 %v36, %v37
    %v39 = vmul.f32 %v37, -0.00019515296
    %v40 = vadd.f32 %v39, 0.008332161
    %v41 = vmul.f32 %v37, %v40
    %v42 = vadd.f32 %v41, -0.16666655
    %v43 = vmul.f32 %v38, %v42
    %v44 = vadd.f32 %v36, %v43
    %v45 = vmul.f32 %v37, 0.5
    %v46 = vsub.f32 1.0, %v45
    %v47 = vmul.f32 %v37, %v37
    %v48 = vmul.f32 %v37, 2.4433157e-05
    %v49 = vadd.f32 %v48, -0.0013887316
    %v50 = vmul.f32 %v37, %v49
    %v51 = vadd.f32 %v50, 0.041666646
    %v52 = vmul.f32 %v47, %v51
    %v53 = vadd.f32 %v46, %v52
    %v54 = vcvt.f32.s32.to.zero.pseudo %v30
    %v55 = vand.u32 %v54, 3
    %vm56 = vcmp.eq.s32.totalorder %v55, 1
    %vm57 = vcmp.eq.s32.totalorder %v55, 3
    %vm58 = vmor %vm56, %vm57
    %vm59 = vcmp.eq.s32.totalorder %v55, 2
    %vm60 = vmor %vm59, %vm57
    %v61 = vsel %vm60, -1.0, 1.0
    %vm62 = vmor %vm56, %vm59
    %v63 = vsel %vm62, -1.0, 1.0
    %v64 = vsel %vm58, %v53, %v44
    %v65 = vmul.f32 %v64, %v61
    %v66 = vsel %vm58, %v44, %v53
    %v67 = vmul.f32 %v66, %v63
    %68 = vst [vmem:[#allocation5] sm:$0x1] %v65
    %69 = vst [vmem:[#allocation6] sm:$0x1] %v67
    // Predicated region
    $region10: #{tpu_custom_call.1} parent=1 // pred_check
      _
    $region11: #{tpu_custom_call.1} parent=1 // pred_check_branch
      %71 = sbr.rel (0) target = $region13
    $region12: #{tpu_custom_call.1} parent=1 // pred_region
      %s73 = ssub.s32 16, 16
      %74 = vsyncadd [#allocation4], %s73
      %s76 = sshll.u32 [#allocation5], 4
      %s77 = int_to_ptr.vmem [resolvable:$true] %s76
      %79 = dma.vmem_to_hbm [thread:$0]  %s77, 16, %s1, [#allocation4]
    $region13: #{tpu_custom_call.1} parent=1 // pred_fallthru
      _
    // Predicated region
    $region14: #{tpu_custom_call.1} parent=1 // pred_check
      _
    $region15: #{tpu_custom_call.1} parent=1 // pred_check_branch
      %81 = sbr.rel (0) target = $region17
    $region16: #{tpu_custom_call.1} parent=1 // pred_region
      %s83 = ssub.s32 16, 16
      %84 = vsyncadd [#allocation7], %s83
      %s86 = sshll.u32 [#allocation6], 4
      %s87 = int_to_ptr.vmem [resolvable:$true] %s86
      %89 = dma.vmem_to_hbm [thread:$0]  %s87, 16, %s2, [#allocation7]
    $region17: #{tpu_custom_call.1} parent=1 // pred_fallthru
      _
    // Predicated region
    $region18: #{tpu_custom_call.1} parent=1 // pred_check
      _
    $region19: #{tpu_custom_call.1} parent=1 // pred_check_branch
      %91 = sbr.rel (0) target = $region21
    $region20: #{tpu_custom_call.1} parent=1 // pred_region
      %92 = dma.done [#allocation4], 16
    $region21: #{tpu_custom_call.1} parent=1 // pred_fallthru
      _
    // Predicated region
    $region22: #{tpu_custom_call.1} parent=1 // pred_check
      _
    $region23: #{tpu_custom_call.1} parent=1 // pred_check_branch
      %94 = sbr.rel (0) target = $region25
    $region24: #{tpu_custom_call.1} parent=1 // pred_region
      %95 = dma.done [#allocation7], 16
    $region25: #{tpu_custom_call.1} parent=1 // pred_fallthru
      _
    %96 = vsyncpa [#allocation3], 1
    %97 = vsyncpa [#allocation4], 1
    %98 = vsyncpa [#allocation7], 1

</llo_original>
